<compile_context>
chip_gen: v7x
topology: tpu7x:2x2x1
jax: 0.10.0
libtpu: 0.0.40
codegen_flags: <defaults>
</compile_context>

<pallas_src>
import functools

import jax
import jax.numpy as jnp
from jax.experimental import pallas as pl
from jax.experimental.pallas import tpu as pltpu


_VMEM_LIMIT_BYTES = 44 * 1024 * 1024       # < v7x 64 MiB physical, with headroom
_WORKING_BUDGET_BYTES = 28 * 1024 * 1024   # double-buffered tiles + f32 temps
_PER_BUFFER_CAP_BYTES = 4 * 1024 * 1024    # pipelining sweet spot (~2-4 MiB)
_FAST_PATH_BYTES = 256 * 1024              # below this, plain XLA wins


def _round_up(x, m):
    return ((x + m - 1) // m) * m


# -----------------------------------------------------------------------------
# Single-pass kernel: whole (N, tile_d) column strip resident per grid step.
# -----------------------------------------------------------------------------
def _bn1d_single_pass_kernel(x_ref, gamma_ref, beta_ref, rmean_ref, rvar_ref,
                             out_ref, new_rmean_ref, new_rvar_ref,
                             *, eps, momentum, n_rows):
    # Stats sweep (f32 accumulation). Do NOT keep the upcast alive across the
    # FMA sweep — re-read the VMEM ref later (vld slots are cheap here).
    xs = x_ref[...].astype(jnp.float32)                    # (N, tile_d)
    s1 = jnp.sum(xs, axis=0, keepdims=True)                # (1, tile_d)
    s2 = jnp.sum(xs * xs, axis=0, keepdims=True)           # (1, tile_d)

    mean = s1 * jnp.float32(1.0 / n_rows)
    # Unbiased variance (torch.var default); clamp: the sum-of-squares form
    # can go slightly negative from cancellation.
    var = (s2 - s1 * mean) * jnp.float32(1.0 / (n_rows - 1))
    var = jnp.maximum(var, jnp.float32(0.0))

    gamma = gamma_ref[...].astype(jnp.float32)
    beta = beta_ref[...].astype(jnp.float32)
    a = gamma * jax.lax.rsqrt(var + jnp.float32(eps))      # (1, tile_d)
    b = beta - mean * a                                    # (1, tile_d)

    # FMA sweep — second read of the VMEM-resident tile.
    out_ref[...] = (x_ref[...].astype(jnp.float32) * a + b).astype(out_ref.dtype)

    m = jnp.float32(momentum)
    new_rmean_ref[...] = ((1.0 - m) * rmean_ref[...].astype(jnp.float32)
                          + m * mean).astype(new_rmean_ref.dtype)
    new_rvar_ref[...] = ((1.0 - m) * rvar_ref[...].astype(jnp.float32)
                         + m * var).astype(new_rvar_ref.dtype)


# -----------------------------------------------------------------------------
# Two-pass kernels (large-N fallback): pass 1 = stats, pass 2 = normalize.
# -----------------------------------------------------------------------------
def _bn1d_stats_kernel(x_ref, gamma_ref, beta_ref, rmean_ref, rvar_ref,
                       a_ref, b_ref, new_rmean_ref, new_rvar_ref,
                       s1_ref, s2_ref,
                       *, eps, momentum, n_rows, tile_n):
    i = pl.program_id(1)   # N tile index (last grid axis, 'arbitrary')

    @pl.when(i == 0)
    def _():
        s1_ref[...] = jnp.zeros_like(s1_ref)
        s2_ref[...] = jnp.zeros_like(s2_ref)

    xs = x_ref[...].astype(jnp.float32)                    # (tile_n, tile_d)
    # Mask rows beyond n_rows (partial last N tile) — they must not pollute
    # the reduction. Partial D columns are harmless (masked on writeback).
    row = jax.lax.broadcasted_iota(jnp.int32, xs.shape, 0) + i * tile_n
    xs = jnp.where(row < n_rows, xs, jnp.float32(0.0))
    s1_ref[...] += jnp.sum(xs, axis=0, keepdims=True)
    s2_ref[...] += jnp.sum(xs * xs, axis=0, keepdims=True)

    @pl.when(i == pl.num_programs(1) - 1)
    def _():
        s1 = s1_ref[...]
        s2 = s2_ref[...]
        mean = s1 * jnp.float32(1.0 / n_rows)
        var = (s2 - s1 * mean) * jnp.float32(1.0 / (n_rows - 1))
        var = jnp.maximum(var, jnp.float32(0.0))
        gamma = gamma_ref[...].astype(jnp.float32)
        beta = beta_ref[...].astype(jnp.float32)
        a = gamma * jax.lax.rsqrt(var + jnp.float32(eps))
        b = beta - mean * a
        a_ref[...] = a
        b_ref[...] = b
        m = jnp.float32(momentum)
        new_rmean_ref[...] = ((1.0 - m) * rmean_ref[...].astype(jnp.float32)
                              + m * mean).astype(new_rmean_ref.dtype)
        new_rvar_ref[...] = ((1.0 - m) * rvar_ref[...].astype(jnp.float32)
                             + m * var).astype(new_rvar_ref.dtype)


def _bn1d_apply_kernel(x_ref, a_ref, b_ref, out_ref):
    out_ref[...] = (x_ref[...].astype(jnp.float32) * a_ref[...]
                    + b_ref[...]).astype(out_ref.dtype)


# -----------------------------------------------------------------------------
# Tile selection
# -----------------------------------------------------------------------------
def _pick_single_pass_tile(n, d, x_itemsize, out_itemsize):
    """Feature-tile width (multiple of 128) for the single-pass kernel, or
    None if even a 128-wide column strip does not fit the VMEM budget."""
    # Per feature column: double-buffered x + out tiles, plus the f32
    # stats-sweep intermediates (upcast and x*x), in bytes.
    per_col = n * (2 * x_itemsize + 2 * out_itemsize + 2 * 4)
    budget_cols = _WORKING_BUDGET_BYTES // max(per_col, 1)
    cap_cols = _PER_BUFFER_CAP_BYTES // max(n * x_itemsize, 1)
    max_cols = (min(budget_cols, cap_cols) // 128) * 128
    if max_cols < 128:
        return None
    d128 = _round_up(d, 128)
    # Target >= ~8 grid steps when D allows: keeps the BlockSpec pipeline
    # overlapping DMA/compute and gives v7x >= 2 tiles to shard across TCs.
    pipeline_tile = max(128, _round_up(pl.cdiv(d, 8), 128))
    return min(max_cols, pipeline_tile, d128)


def _pick_two_pass_tiles(n, d, x_itemsize):
    tile_d = min(512, _round_up(max(d, 1), 128))
    rows = _PER_BUFFER_CAP_BYTES // 2 // max(tile_d * x_itemsize, 1)
    rows = max(8, (rows // 8) * 8)
    tile_n = min(_round_up(n, 8), rows)
    return tile_n, tile_d


# -----------------------------------------------------------------------------
# Wrapper
# -----------------------------------------------------------------------------
def _bn1d_jnp(x2, gamma, beta, running_mean, running_var, eps, momentum):
    n = x2.shape[0]
    xmean = jnp.mean(x2, axis=0, keepdims=True)
    xvar = jnp.sum((x2 - xmean) ** 2, axis=0, keepdims=True) / (n - 1)
    out = gamma * (x2 - xmean) / jnp.sqrt(xvar + eps) + beta
    new_rm = (1 - momentum) * running_mean + momentum * xmean.reshape(-1)
    new_rv = (1 - momentum) * running_var + momentum * xvar.reshape(-1)
    return out, new_rm, new_rv


def batchnorm1d(x, gamma, beta, running_mean, running_var,
                eps=1e-5, momentum=0.1, *,
                force_pallas=False, two_pass=None, tile_n=None, tile_d=None):
    """Training-mode BatchNorm1d forward. x is (N, D) or (B, T, D).

    Returns (out, new_running_mean, new_running_var).
    """
    orig_shape = x.shape
    if x.ndim == 3:
        x2 = x.reshape(-1, x.shape[-1])      # reduce over (0, 1) == axis 0
    elif x.ndim == 2:
        x2 = x
    else:
        raise ValueError("expected 2-D or 3-D input")
    n, d = x2.shape
    assert n >= 2, "unbiased variance needs at least 2 reduced elements"
    # TODO(synk): eval mode (normalize with running stats) not implemented;
    # the reference module is constructed with training=True.

    # Small-problem fast path: fixed launch + per-step overhead dominates;
    # plain XLA fusion wins outright.
    if (not force_pallas) and x2.size * x2.dtype.itemsize <= _FAST_PATH_BYTES:
        out, new_rm, new_rv = _bn1d_jnp(x2, gamma, beta, running_mean,
                                        running_var, eps, momentum)
        return out.reshape(orig_shape), new_rm, new_rv

    x_it = x2.dtype.itemsize
    g2 = gamma.reshape(1, d)
    b2 = beta.reshape(1, d)
    rm2 = running_mean.reshape(1, d)
    rv2 = running_var.reshape(1, d)

    tile_single = _pick_single_pass_tile(n, d, x_it, x_it)
    use_two_pass = two_pass if two_pass is not None else (tile_single is None)

    cparams_1d = pltpu.CompilerParams(
        dimension_semantics=("parallel",),
        vmem_limit_bytes=_VMEM_LIMIT_BYTES)

    if not use_two_pass:
        td = tile_d if tile_d is not None else (tile_single or 128)
        num_d = pl.cdiv(d, td)        # last D block may be partial (masked)

        row_spec = pl.BlockSpec((1, td), lambda j: (0, j))
        mat_spec = pl.BlockSpec((n, td), lambda j: (0, j))

        kernel = functools.partial(_bn1d_single_pass_kernel,
                                   eps=eps, momentum=momentum, n_rows=n)
        out, new_rm, new_rv = pl.pallas_call(
            kernel,
            grid=(num_d,),
            in_specs=[mat_spec, row_spec, row_spec, row_spec, row_spec],
            out_specs=(mat_spec, row_spec, row_spec),
            out_shape=(
                jax.ShapeDtypeStruct((n, d), x.dtype),
                jax.ShapeDtypeStruct((1, d), running_mean.dtype),
                jax.ShapeDtypeStruct((1, d), running_var.dtype),
            ),
            compiler_params=cparams_1d,
        )(x2, g2, b2, rm2, rv2)
    else:
        # Two-pass large-N path: one extra HBM read of x, but the working set
        # is bounded and both passes expose real grid parallelism.
        tn_def, td_def = _pick_two_pass_tiles(n, d, x_it)
        tn = tile_n if tile_n is not None else tn_def
        td = tile_d if tile_d is not None else td_def
        num_d = pl.cdiv(d, td)
        num_n = pl.cdiv(n, tn)

        x_spec = pl.BlockSpec((tn, td), lambda j, i: (i, j))
        row_spec = pl.BlockSpec((1, td), lambda j, i: (0, j))

        stats_kernel = functools.partial(_bn1d_stats_kernel, eps=eps,
                                         momentum=momentum, n_rows=n, tile_n=tn)
        a_sc, b_sc, new_rm, new_rv = pl.pallas_call(
            stats_kernel,
            grid=(num_d, num_n),
            in_specs=[x_spec, row_spec, row_spec, row_spec, row_spec],
            out_specs=(row_spec, row_spec, row_spec, row_spec),
            out_shape=(
                jax.ShapeDtypeStruct((1, d), jnp.float32),
                jax.ShapeDtypeStruct((1, d), jnp.float32),
                jax.ShapeDtypeStruct((1, d), running_mean.dtype),
                jax.ShapeDtypeStruct((1, d), running_var.dtype),
            ),
            scratch_shapes=[pltpu.VMEM((1, td), jnp.float32),
                            pltpu.VMEM((1, td), jnp.float32)],
            compiler_params=pltpu.CompilerParams(
                dimension_semantics=("parallel", "arbitrary"),
                vmem_limit_bytes=_VMEM_LIMIT_BYTES),
        )(x2, g2, b2, rm2, rv2)

        out = pl.pallas_call(
            _bn1d_apply_kernel,
            grid=(num_d, num_n),
            in_specs=[x_spec, row_spec, row_spec],
            out_specs=x_spec,
            out_shape=jax.ShapeDtypeStruct((n, d), x.dtype),
            compiler_params=pltpu.CompilerParams(
                dimension_semantics=("parallel", "parallel"),
                vmem_limit_bytes=_VMEM_LIMIT_BYTES),
        )(x2, a_sc, b_sc)

    new_rm = new_rm[0, :]
    new_rv = new_rv[0, :]
    if len(orig_shape) == 3:
        out = out.reshape(orig_shape)
    return out, new_rm, new_rv


# -----------------------------------------------------------------------------
# Reference + tests
# -----------------------------------------------------------------------------
def _ref_bn(x, gamma, beta, running_mean, running_var, eps, momentum):
    dim = 0 if x.ndim == 2 else (0, 1)
    xmean = jnp.mean(x, axis=dim, keepdims=True)
    cnt = x.shape[0] if x.ndim == 2 else x.shape[0] * x.shape[1]
    xvar = jnp.sum((x - xmean) ** 2, axis=dim, keepdims=True) / (cnt - 1)
    out = gamma * (x - xmean) / jnp.sqrt(xvar + eps) + beta
    new_rm = (1 - momentum) * running_mean + momentum * xmean.reshape(-1)
    new_rv = (1 - momentum) * running_var + momentum * xvar.reshape(-1)
    return out, new_rm, new_rv


def _check(x, gamma, beta, rm, rv, **kw):
    out, nrm, nrv = batchnorm1d(x, gamma, beta, rm, rv,
                                eps=1e-5, momentum=0.1, **kw)
    jax.block_until_ready((out, nrm, nrv))
    ref_out, ref_rm, ref_rv = _ref_bn(x, gamma, beta, rm, rv, 1e-5, 0.1)
    assert out.shape == x.shape
    assert jnp.allclose(out, ref_out, atol=1e-4, rtol=1e-4), f"out mismatch {kw}"
    assert jnp.allclose(nrm, ref_rm, atol=1e-5, rtol=1e-5), f"rmean mismatch {kw}"
    assert jnp.allclose(nrv, ref_rv, atol=1e-4, rtol=1e-4), f"rvar mismatch {kw}"


if __name__ == "__main__":
    key = jax.random.PRNGKey(0)
    N, D = 8, 32  # small shapes: batch=8, hidden=32

    gamma = jnp.ones((D,), dtype=jnp.float32)
    beta = jnp.zeros((D,), dtype=jnp.float32)
    running_mean = jnp.zeros((D,), dtype=jnp.float32)
    running_var = jnp.ones((D,), dtype=jnp.float32)

    # 2-D path: fast path (plain jnp) and forced single-pass Pallas kernel.
    x = jax.random.normal(key, (N, D), dtype=jnp.float32)
    _check(x, gamma, beta, running_mean, running_var)
    _check(x, gamma, beta, running_mean, running_var, force_pallas=True)

    # 3-D path (reduction over dims (0, 1)) through the Pallas kernel.
    x3 = jax.random.normal(jax.random.PRNGKey(1), (2, 8, D), dtype=jnp.float32)
    _check(x3, gamma, beta, running_mean, running_var, force_pallas=True)

    # Multi-tile D with a partial last block (no padding / slicing in wrapper).
    D2 = 160
    gamma2 = jnp.ones((D2,), dtype=jnp.float32) * 1.5
    beta2 = jnp.full((D2,), 0.25, dtype=jnp.float32)
    rm2 = jnp.zeros((D2,), dtype=jnp.float32)
    rv2 = jnp.ones((D2,), dtype=jnp.float32)
    xl = jax.random.normal(jax.random.PRNGKey(2), (100, D2), dtype=jnp.float32)
    _check(xl, gamma2, beta2, rm2, rv2, force_pallas=True)

    # Two-pass (large-N fallback) path, forced with small tiles so it exercises
    # multiple/partial N tiles and partial D tiles.
    _check(xl, gamma2, beta2, rm2, rv2, force_pallas=True, two_pass=True,
           tile_n=32, tile_d=128)

    print("KERNEL_OK")
</pallas_src>

<mosaic_0001>
module attributes {stable_mosaic.version = 11 : i64} {
  func.func @_bn1d_single_pass_kernel(%arg0: i32, %arg1: memref<8x128xf32, #tpu.memory_space<vmem>>, %arg2: memref<1x128xf32, #tpu.memory_space<vmem>>, %arg3: memref<1x128xf32, #tpu.memory_space<vmem>>, %arg4: memref<1x128xf32, #tpu.memory_space<vmem>>, %arg5: memref<1x128xf32, #tpu.memory_space<vmem>>, %arg6: memref<8x128xf32, #tpu.memory_space<vmem>>, %arg7: memref<1x128xf32, #tpu.memory_space<vmem>>, %arg8: memref<1x128xf32, #tpu.memory_space<vmem>>) attributes {dimension_semantics = [#tpu.dimension_semantics<parallel>], iteration_bounds = array<i64: 1>, scalar_prefetch = 0 : i64, scratch_operands = 0 : i64, tpu.core_type = #tpu.core_type<tc>, window_params = [{transform_indices = @transform_0, window_bounds = array<i64: 8, 128>}, {transform_indices = @transform_1, window_bounds = array<i64: 1, 128>}, {transform_indices = @transform_2, window_bounds = array<i64: 1, 128>}, {transform_indices = @transform_3, window_bounds = array<i64: 1, 128>}, {transform_indices = @transform_4, window_bounds = array<i64: 1, 128>}, {transform_indices = @transform_5, window_bounds = array<i64: 8, 128>}, {transform_indices = @transform_6, window_bounds = array<i64: 1, 128>}, {transform_indices = @transform_7, window_bounds = array<i64: 1, 128>}]} {
    %c0 = arith.constant 0 : index
    %c0_0 = arith.constant 0 : index
    %0 = vector.load %arg1[%c0, %c0_0] : memref<8x128xf32, #tpu.memory_space<vmem>>, vector<8x128xf32>
    %cst = arith.constant dense<0.000000e+00> : vector<128xf32>
    %1 = vector.multi_reduction <add>, %0, %cst [0] : vector<8x128xf32> to vector<128xf32>
    %2 = vector.shape_cast %1 : vector<128xf32> to vector<1x128xf32>
    %3 = arith.mulf %0, %0 : vector<8x128xf32>
    %cst_1 = arith.constant dense<0.000000e+00> : vector<128xf32>
    %4 = vector.multi_reduction <add>, %3, %cst_1 [0] : vector<8x128xf32> to vector<128xf32>
    %5 = vector.shape_cast %4 : vector<128xf32> to vector<1x128xf32>
    %cst_2 = arith.constant 1.250000e-01 : f32
    %6 = vector.broadcast %cst_2 : f32 to vector<1x128xf32>
    %7 = arith.mulf %2, %6 : vector<1x128xf32>
    %8 = arith.mulf %2, %7 : vector<1x128xf32>
    %9 = arith.subf %5, %8 : vector<1x128xf32>
    %cst_3 = arith.constant 0.142857149 : f32
    %10 = vector.broadcast %cst_3 : f32 to vector<1x128xf32>
    %11 = arith.mulf %9, %10 : vector<1x128xf32>
    %cst_4 = arith.constant 0.000000e+00 : f32
    %12 = vector.broadcast %cst_4 : f32 to vector<1x128xf32>
    %13 = arith.maximumf %11, %12 : vector<1x128xf32>
    %c0_5 = arith.constant 0 : index
    %c0_6 = arith.constant 0 : index
    %14 = vector.load %arg2[%c0_5, %c0_6] : memref<1x128xf32, #tpu.memory_space<vmem>>, vector<1x128xf32>
    %c0_7 = arith.constant 0 : index
    %c0_8 = arith.constant 0 : index
    %15 = vector.load %arg3[%c0_7, %c0_8] : memref<1x128xf32, #tpu.memory_space<vmem>>, vector<1x128xf32>
    %cst_9 = arith.constant 9.99999974E-6 : f32
    %16 = vector.broadcast %cst_9 : f32 to vector<1x128xf32>
    %17 = arith.addf %13, %16 : vector<1x128xf32>
    %18 = math.rsqrt %17 : vector<1x128xf32>
    %19 = arith.mulf %14, %18 : vector<1x128xf32>
    %20 = arith.mulf %7, %19 : vector<1x128xf32>
    %21 = arith.subf %15, %20 : vector<1x128xf32>
    %c0_10 = arith.constant 0 : index
    %c0_11 = arith.constant 0 : index
    %22 = vector.load %arg1[%c0_10, %c0_11] : memref<8x128xf32, #tpu.memory_space<vmem>>, vector<8x128xf32>
    %23 = vector.broadcast %19 : vector<1x128xf32> to vector<8x128xf32>
    %24 = arith.mulf %22, %23 : vector<8x128xf32>
    %25 = vector.broadcast %21 : vector<1x128xf32> to vector<8x128xf32>
    %26 = arith.addf %24, %25 : vector<8x128xf32>
    %c0_12 = arith.constant 0 : index
    %c0_13 = arith.constant 0 : index
    %27 = vector.load %arg6[%c0_12, %c0_13] : memref<8x128xf32, #tpu.memory_space<vmem>>, vector<8x128xf32>
    tpu.vector_store %arg6[%c0_12, %c0_13], %26 {strides = array<i32>} : memref<8x128xf32, #tpu.memory_space<vmem>>, vector<8x128xf32>,
    %cst_14 = arith.constant 1.000000e+00 : f32
    %cst_15 = arith.constant 1.000000e-01 : f32
    %28 = arith.subf %cst_14, %cst_15 : f32
    %c0_16 = arith.constant 0 : index
    %c0_17 = arith.constant 0 : index
    %29 = vector.load %arg4[%c0_16, %c0_17] : memref<1x128xf32, #tpu.memory_space<vmem>>, vector<1x128xf32>
    %30 = vector.broadcast %28 : f32 to vector<1x128xf32>
    %31 = arith.mulf %30, %29 : vector<1x128xf32>
    %cst_18 = arith.constant 1.000000e-01 : f32
    %32 = vector.broadcast %cst_18 : f32 to vector<1x128xf32>
    %33 = arith.mulf %32, %7 : vector<1x128xf32>
    %34 = arith.addf %31, %33 : vector<1x128xf32>
    %c0_19 = arith.constant 0 : index
    %c0_20 = arith.constant 0 : index
    %35 = vector.load %arg7[%c0_19, %c0_20] : memref<1x128xf32, #tpu.memory_space<vmem>>, vector<1x128xf32>
    tpu.vector_store %arg7[%c0_19, %c0_20], %34 {strides = array<i32>} : memref<1x128xf32, #tpu.memory_space<vmem>>, vector<1x128xf32>,
    %cst_21 = arith.constant 1.000000e+00 : f32
    %cst_22 = arith.constant 1.000000e-01 : f32
    %36 = arith.subf %cst_21, %cst_22 : f32
    %c0_23 = arith.constant 0 : index
    %c0_24 = arith.constant 0 : index
    %37 = vector.load %arg5[%c0_23, %c0_24] : memref<1x128xf32, #tpu.memory_space<vmem>>, vector<1x128xf32>
    %38 = vector.broadcast %36 : f32 to vector<1x128xf32>
    %39 = arith.mulf %38, %37 : vector<1x128xf32>
    %cst_25 = arith.constant 1.000000e-01 : f32
    %40 = vector.broadcast %cst_25 : f32 to vector<1x128xf32>
    %41 = arith.mulf %40, %13 : vector<1x128xf32>
    %42 = arith.addf %39, %41 : vector<1x128xf32>
    %c0_26 = arith.constant 0 : index
    %c0_27 = arith.constant 0 : index
    %43 = vector.load %arg8[%c0_26, %c0_27] : memref<1x128xf32, #tpu.memory_space<vmem>>, vector<1x128xf32>
    tpu.vector_store %arg8[%c0_26, %c0_27], %42 {strides = array<i32>} : memref<1x128xf32, #tpu.memory_space<vmem>>, vector<1x128xf32>,
    return
  }
  func.func @transform_0(%arg0: i32) -> (i32, i32) {
    %c0_i32 = arith.constant 0 : i32
    %c0_i32_0 = arith.constant 0 : i32
    return %c0_i32, %arg0 : i32, i32
  }
  func.func @transform_1(%arg0: i32) -> (i32, i32) {
    %c0_i32 = arith.constant 0 : i32
    %c0_i32_0 = arith.constant 0 : i32
    return %c0_i32, %arg0 : i32, i32
  }
  func.func @transform_2(%arg0: i32) -> (i32, i32) {
    %c0_i32 = arith.constant 0 : i32
    %c0_i32_0 = arith.constant 0 : i32
    return %c0_i32, %arg0 : i32, i32
  }
  func.func @transform_3(%arg0: i32) -> (i32, i32) {
    %c0_i32 = arith.constant 0 : i32
    %c0_i32_0 = arith.constant 0 : i32
    return %c0_i32, %arg0 : i32, i32
  }
  func.func @transform_4(%arg0: i32) -> (i32, i32) {
    %c0_i32 = arith.constant 0 : i32
    %c0_i32_0 = arith.constant 0 : i32
    return %c0_i32, %arg0 : i32, i32
  }
  func.func @transform_5(%arg0: i32) -> (i32, i32) {
    %c0_i32 = arith.constant 0 : i32
    %c0_i32_0 = arith.constant 0 : i32
    return %c0_i32, %arg0 : i32, i32
  }
  func.func @transform_6(%arg0: i32) -> (i32, i32) {
    %c0_i32 = arith.constant 0 : i32
    %c0_i32_0 = arith.constant 0 : i32
    return %c0_i32, %arg0 : i32, i32
  }
  func.func @transform_7(%arg0: i32) -> (i32, i32) {
    %c0_i32 = arith.constant 0 : i32
    %c0_i32_0 = arith.constant 0 : i32
    return %c0_i32, %arg0 : i32, i32
  }
}

</mosaic_0001>

<llo_original>
// kernel: tpu_custom_call.1
$region0: #{tpu_custom_call.1}
  #allocation0 [shape = 'u32[]', space=smem, size = 0x4, offset = 0x4, fixed_abs, tag = 'smem constant byte address 0x4 - core index']
  #allocation1 [shape = 'u32[144,128]{1,0:T(1,128)}', space=vmem, size = 0x12000, scoped, tag = 'internal scratch']
  %s0 = inlined_call_operand.hbm [shape: f32[8,32], index: 0, kind: input, shape index: {}]
  %s1 = inlined_call_operand.vmem [shape: f32[1,32], index: 1, kind: input, shape index: {}]
  %s2 = inlined_call_operand.vmem [shape: f32[1,32], index: 2, kind: input, shape index: {}]
  %s3 = inlined_call_operand.vmem [shape: f32[1,32], index: 3, kind: input, shape index: {}]
  %s4 = inlined_call_operand.vmem [shape: f32[1,32], index: 4, kind: input, shape index: {}]
  %s5 = inlined_call_operand.hbm [shape: f32[8,32], index: 5, kind: output, shape index: {0}]
  %s6 = inlined_call_operand.hbm [shape: f32[1,32], index: 6, kind: output, shape index: {1}]
  %s7 = inlined_call_operand.hbm [shape: f32[1,32], index: 7, kind: output, shape index: {2}]
  %8 = xla_tuple %s5, %s6, %s7
  %s9 = sld [smem:[#allocation0]]
  $region50: #{tpu_custom_call.1} parent=0
    _
  %s11 = ssub.s32 1, %s9
  %s12 = scalar_select 0, %s11, %s9
  $region1: #{tpu_custom_call.1} parent=0
    #allocation2 [shape = 'u8[4096]{0}', space=vmem, size = 0x1000, scoped, tag = 'input window, operand 0, single buffered']
    #allocation3 [shape = 's32[1]{0}', space=sflag, size = 0x4, scoped, tag = 'scoped memory for tpu_custom_call.1']
    #allocation4 [shape = 's32[1]{0}', space=sflag, size = 0x4, scoped, tag = 'scoped memory for tpu_custom_call.1']
    #allocation5 [shape = 'u8[4096]{0}', space=vmem, size = 0x1000, scoped, tag = 'output window, operand 0, single buffered']
    #allocation6 [shape = 'u8[512]{0}', space=vmem, size = 0x400, scoped, tag = 'output window, operand 1, single buffered']
    #allocation7 [shape = 's32[1]{0}', space=sflag, size = 0x4, scoped, tag = 'scoped memory for tpu_custom_call.1']
    #allocation8 [shape = 'u8[512]{0}', space=vmem, size = 0x400, scoped, tag = 'output window, operand 2, single buffered']
    %13 = vsyncpa [#allocation3], 0
    %14 = vsyncpa [#allocation4], 0
    %15 = vsyncpa [#allocation7], 0
    // Predicated region
    $region2: #{tpu_custom_call.1} parent=1 // pred_check
      _
    $region3: #{tpu_custom_call.1} parent=1 // pred_check_branch
      %17 = sbr.rel (0) target = $region5
    $region4: #{tpu_custom_call.1} parent=1 // pred_region
      %s19 = ssub.s32 128, 128
      %20 = vsyncadd [#allocation3], %s19
      %s22 = sshll.u32 [#allocation2], 4
      %s23 = int_to_ptr.vmem [resolvable:$true] %s22
      %25 = dma.hbm_to_vmem [thread:$0]  %s0, 128, %s23, [#allocation3]
    $region5: #{tpu_custom_call.1} parent=1 // pred_fallthru
      _
    // Predicated region
    $region6: #{tpu_custom_call.1} parent=1 // pred_check
      _
    $region7: #{tpu_custom_call.1} parent=1 // pred_check_branch
      %27 = sbr.rel (0) target = $region9
    $region8: #{tpu_custom_call.1} parent=1 // pred_region
      _
    $region9: #{tpu_custom_call.1} parent=1 // pred_fallthru
      _
    // Predicated region
    $region10: #{tpu_custom_call.1} parent=1 // pred_check
      _
    $region11: #{tpu_custom_call.1} parent=1 // pred_check_branch
      %29 = sbr.rel (0) target = $region13
    $region12: #{tpu_custom_call.1} parent=1 // pred_region
      _
    $region13: #{tpu_custom_call.1} parent=1 // pred_fallthru
      _
    // Predicated region
    $region14: #{tpu_custom_call.1} parent=1 // pred_check
      _
    $region15: #{tpu_custom_call.1} parent=1 // pred_check_branch
      %31 = sbr.rel (0) target = $region17
    $region16: #{tpu_custom_call.1} parent=1 // pred_region
      _
    $region17: #{tpu_custom_call.1} parent=1 // pred_fallthru
      _
    // Predicated region
    $region18: #{tpu_custom_call.1} parent=1 // pred_check
      _
    $region19: #{tpu_custom_call.1} parent=1 // pred_check_branch
      %33 = sbr.rel (0) target = $region21
    $region20: #{tpu_custom_call.1} parent=1 // pred_region
      _
    $region21: #{tpu_custom_call.1} parent=1 // pred_fallthru
      _
    // Predicated region
    $region22: #{tpu_custom_call.1} parent=1 // pred_check
      _
    $region23: #{tpu_custom_call.1} parent=1 // pred_check_branch
      %35 = sbr.rel (0) target = $region25
    $region24: #{tpu_custom_call.1} parent=1 // pred_region
      %36 = dma.done [#allocation3], 128
    $region25: #{tpu_custom_call.1} parent=1 // pred_fallthru
      _
    %v37 = vld [vmem:[#allocation2] sm:$0xff]
    %v38 = vrot.slane %v37, 4
    %v39 = vadd.f32 %v37, %v38
    %v40 = vrot.slane %v39, 2
    %v41 = vadd.f32 %v39, %v40
    %v42 = vrot.slane %v41, 1
    %v43 = vadd.f32 %v41, %v42
    %v44 = vmul.f32 %v37, %v37
    %v45 = vrot.slane %v44, 4
    %v46 = vadd.f32 %v44, %v45
    %v47 = vrot.slane %v46, 2
    %v48 = vadd.f32 %v46, %v47
    %v49 = vrot.slane %v48, 1
    %v50 = vadd.f32 %v48, %v49
    %v51 = vmul.f32 %v43, 0.125
    %v52 = vmul.f32 %v43, %v51
    %v53 = vsub.f32 %v50, %v52
    %v54 = vmul.f32 %v53, 0.14285715
    %v55 = vmax.f32 %v54, 0.0
    %v56 = vld [vmem:[%s1] sm:$0x1]
    %v57 = vld [vmem:[%s2] sm:$0x1]
    %v58 = vadd.f32 %v55, 1e-05
    %v59 = vrsqrt.pop %v58
    %v60 = vmul.f32 %v56, %v59
    %v61 = vmul.f32 %v51, %v60
    %v62 = vsub.f32 %v57, %v61
    %v64 = vlaneseq
    %v65 = vshrl.u32 %v64, 7
    %v66 = vsub.s32 0, %v65
    %v67 = vrot.slane %v60, %v66
    %v69 = vmul.f32 %v37, %v67
    %v71 = vlaneseq
    %v72 = vshrl.u32 %v71, 7
    %v73 = vsub.s32 0, %v72
    %v74 = vrot.slane %v62, %v73
    %v76 = vadd.f32 %v69, %v74
    %77 = vst [vmem:[#allocation5] sm:$0xff] %v76
    %v78 = vld [vmem:[%s3] sm:$0x1]
    %v79 = vmul.f32 %v78, 0.9
    %v80 = vmul.f32 %v51, 0.1
    %v81 = vadd.f32 %v79, %v80
    %82 = vst [vmem:[#allocation6] sm:$0x1] %v81
    %v83 = vld [vmem:[%s4] sm:$0x1]
    %v84 = vmul.f32 %v83, 0.9
    %v85 = vmul.f32 %v55, 0.1
    %v86 = vadd.f32 %v84, %v85
    %87 = vst [vmem:[#allocation8] sm:$0x1] %v86
    // Predicated region
    $region26: #{tpu_custom_call.1} parent=1 // pred_check
      _
    $region27: #{tpu_custom_call.1} parent=1 // pred_check_branch
      %89 = sbr.rel (0) target = $region29
    $region28: #{tpu_custom_call.1} parent=1 // pred_region
      %s91 = ssub.s32 128, 128
      %92 = vsyncadd [#allocation4], %s91
      %s94 = sshll.u32 [#allocation5], 4
      %s95 = int_to_ptr.vmem [resolvable:$true] %s94
      %97 = dma.vmem_to_hbm [thread:$0]  %s95, 128, %s5, [#allocation4]
    $region29: #{tpu_custom_call.1} parent=1 // pred_fallthru
      _
    // Predicated region
    $region30: #{tpu_custom_call.1} parent=1 // pred_check
      _
    $region31: #{tpu_custom_call.1} parent=1 // pred_check_branch
      %99 = sbr.rel (0) target = $region33
    $region32: #{tpu_custom_call.1} parent=1 // pred_region
      %s101 = ssub.s32 16, 16
      %102 = vsyncadd [#allocation7], %s101
      %s104 = sshll.u32 [#allocation6], 4
      %s105 = int_to_ptr.vmem [resolvable:$true] %s104
      %107 = dma.vmem_to_hbm [thread:$0]  %s105, 16, %s6, [#allocation7]
    $region33: #{tpu_custom_call.1} parent=1 // pred_fallthru
      _
    // Predicated region
    $region34: #{tpu_custom_call.1} parent=1 // pred_check
      _
    $region35: #{tpu_custom_call.1} parent=1 // pred_check_branch
      %109 = sbr.rel (0) target = $region37
    $region36: #{tpu_custom_call.1} parent=1 // pred_region
      %s111 = ssub.s32 16, 16
      %112 = vsyncadd [#allocation7], %s111
      %s114 = sshll.u32 [#allocation8], 4
      %s115 = int_to_ptr.vmem [resolvable:$true] %s114
      %117 = dma.vmem_to_hbm [thread:$0]  %s115, 16, %s7, [#allocation7]
    $region37: #{tpu_custom_call.1} parent=1 // pred_fallthru
      _
    // Predicated region
    $region38: #{tpu_custom_call.1} parent=1 // pred_check
      _
    $region39: #{tpu_custom_call.1} parent=1 // pred_check_branch
      %119 = sbr.rel (0) target = $region41
    $region40: #{tpu_custom_call.1} parent=1 // pred_region
      %120 = dma.done [#allocation4], 128
    $region41: #{tpu_custom_call.1} parent=1 // pred_fallthru
      _
    // Predicated region
    $region42: #{tpu_custom_call.1} parent=1 // pred_check
      _
    $region43: #{tpu_custom_call.1} parent=1 // pred_check_branch
      %122 = sbr.rel (0) target = $region45
    $region44: #{tpu_custom_call.1} parent=1 // pred_region
      %123 = dma.done [#allocation7], 16
    $region45: #{tpu_custom_call.1} parent=1 // pred_fallthru
      _
    // Predicated region
    $region46: #{tpu_custom_call.1} parent=1 // pred_check
      _
    $region47: #{tpu_custom_call.1} parent=1 // pred_check_branch
      %125 = sbr.rel (0) target = $region49
    $region48: #{tpu_custom_call.1} parent=1 // pred_region
      %126 = dma.done [#allocation7], 16
    $region49: #{tpu_custom_call.1} parent=1 // pred_fallthru
      _
    %127 = vsyncpa [#allocation3], 1
    %128 = vsyncpa [#allocation4], 1
    %129 = vsyncpa [#allocation7], 1

</llo_original>
